<compile_context>
chip_gen: v7x
topology: tpu7x:2x2x1
jax: 0.10.0
libtpu: 0.0.40
codegen_flags: <defaults>
</compile_context>

<pallas_src>
import functools

import jax
import jax.numpy as jnp
from jax.experimental import pallas as pl
from jax.experimental.pallas import tpu as pltpu


def _facconv_kernel(x_ref, w1_ref, w2_ref, shift_ref, o_ref, *,
                    K, W, pad, W1buf, Lout_pad, XW):
    # x_ref:     (Nb, C_in, H*W)      raw input block (flat rows, row stride W)
    # w1_ref:    (K, C_in, C_in)      Kx1-conv taps, w1_ref[kh, ci, cj]
    # w2_ref:    (K, C_out, C_in)     1xK-conv taps with BN scale folded in
    # shift_ref: (C_out, 1)           folded BN shift
    # o_ref:     (Nb, C_out, Lout_pad)  flat output, row stride W, lane-dense
    Nb, C_in, HW = x_ref.shape
    C_out = o_ref.shape[1]

    ML = pad * (W + 1)            # left zeros: pad (W-conv margin) + pad*W (top H pad)
    MR = XW - ML - HW             # right zeros: bottom H pad + slack

    # Hoisted once per grid step: per-tap W-boundary masks for the 1xK conv.
    col = jax.lax.broadcasted_iota(jnp.int32, (1, Lout_pad), 1) % W
    w_masks = [(col >= pad - kw) & (col < W + pad - kw) for kw in range(K)]

    # Hoisted tiny weight tiles and BN shift.
    w1_taps = [w1_ref[kh] for kh in range(K)]
    w2_taps = [w2_ref[kw] for kw in range(K)]
    shift = shift_ref[...].astype(jnp.float32)              # (C_out, 1)

    zeros_l = jnp.zeros((C_in, ML), jnp.float32) if ML > 0 else None
    zeros_r = jnp.zeros((C_in, MR), jnp.float32) if MR > 0 else None

    for n in range(Nb):
        # Fused ReLU + zero padding (single contiguous placement in a zero slab).
        xr = jnp.maximum(x_ref[n].astype(jnp.float32), 0.0)  # (C_in, H*W)
        parts = [p_ for p_ in (zeros_l, xr, zeros_r) if p_ is not None]
        xbuf = parts[0] if len(parts) == 1 else jnp.concatenate(parts, axis=1)

        # Conv (K x 1) over H: K accumulated matmuls on lane-shifted slices.
        y1 = jnp.dot(w1_taps[0], xbuf[:, 0:W1buf],
                     preferred_element_type=jnp.float32)     # (C_in, W1buf)
        for kh in range(1, K):
            y1 = y1 + jnp.dot(w1_taps[kh], xbuf[:, kh * W: kh * W + W1buf],
                              preferred_element_type=jnp.float32)

        # Conv (1 x K) over W: K accumulated masked matmuls, then BN shift.
        acc = jnp.dot(w2_taps[0],
                      jnp.where(w_masks[0], y1[:, 0:Lout_pad], 0.0),
                      preferred_element_type=jnp.float32)    # (C_out, Lout_pad)
        for kw in range(1, K):
            acc = acc + jnp.dot(w2_taps[kw],
                                jnp.where(w_masks[kw], y1[:, kw: kw + Lout_pad], 0.0),
                                preferred_element_type=jnp.float32)

        o_ref[n] = (acc + shift).astype(o_ref.dtype)


def fac_conv(x, w1, w2, bn_gamma, bn_beta, bn_mean, bn_var, *,
             kernel_length, stride, padding, eps=1e-5):
    """FacConv forward (inference-mode BN).  x: (N, C_in, H, W) NCHW;
    w1: (C_in, C_in, K, 1); w2: (C_out, C_in, 1, K); BN params: (C_out,)."""
    N, C_in, H, W = x.shape
    K, s, p = kernel_length, stride, padding
    C_out = w2.shape[0]

    if s != 1:
        # TODO(synk): stride > 1 is not supported by the fused-lane kernel.
        raise NotImplementedError("fac_conv Pallas kernel supports stride == 1 only")

    H1 = H + 2 * p - K + 1            # output height (Kx1 conv)
    W2o = W + 2 * p - K + 1           # output width  (1xK conv)
    if H1 <= 0 or W2o <= 0:
        raise ValueError("FacConv output would be empty for these shapes")
    if W2o > W:
        # TODO(synk): 2*padding > kernel_length - 1 (output rows wider than input
        # rows) would need a wider intermediate row stride; not supported.
        raise NotImplementedError(
            "fac_conv Pallas kernel requires 2*padding <= kernel_length - 1")

    HW = H * W
    Lout = H1 * W                              # valid flat output lanes
    Lout_pad = ((Lout + 127) // 128) * 128     # lane-dense (128-aligned) stores
    W1buf = Lout_pad + K - 1                   # width of the H-conv intermediate
    XW = W1buf + (K - 1) * W                   # width of the padded input slab

    x_flat = x.reshape(N, C_in, HW)            # free reshape (merges trailing dims)

    # Per-tap weights: w1k[kh, ci, cj] = w1[ci, cj, kh, 0].
    w1k = jnp.transpose(w1[:, :, :, 0], (2, 0, 1)).astype(jnp.float32)
    # Fold BatchNorm (inference): scale into w2's taps, shift as a broadcast add.
    inv_std = jax.lax.rsqrt(bn_var.astype(jnp.float32) + eps)
    scale = bn_gamma.astype(jnp.float32) * inv_std                      # (C_out,)
    shift = (bn_beta.astype(jnp.float32)
             - bn_mean.astype(jnp.float32) * scale).reshape(C_out, 1)
    w2k = (jnp.transpose(w2[:, :, 0, :], (2, 0, 1)).astype(jnp.float32)
           * scale[None, :, None])                                      # (K, C_out, C_in)

    # Batch elements per grid step: divisor of N, keep >= 2 grid steps (v7x has
    # 2 TensorCores), stay inside a conservative VMEM budget (v7x scoped default
    # is 32 MiB), and cap the in-kernel unroll.
    itemsize = jnp.dtype(x.dtype).itemsize
    per_image = (C_in * HW + C_out * Lout_pad) * itemsize * 2   # double-buffered
    vmem_budget = 24 << 20
    nb = 1
    for d in range(1, min(N, 16) + 1):
        if N % d:
            continue
        if d * per_image > vmem_budget:
            continue
        if N >= 2 and N // d < 2:
            continue
        nb = d
    grid = N // nb

    kernel = functools.partial(_facconv_kernel, K=K, W=W, pad=p,
                               W1buf=W1buf, Lout_pad=Lout_pad, XW=XW)

    out_flat = pl.pallas_call(
        kernel,
        out_shape=jax.ShapeDtypeStruct((N, C_out, Lout_pad), x.dtype),
        grid_spec=pltpu.PrefetchScalarGridSpec(
            num_scalar_prefetch=0,
            grid=(grid,),
            in_specs=[
                pl.BlockSpec((nb, C_in, HW), lambda g: (g, 0, 0)),
                pl.BlockSpec((K, C_in, C_in), lambda g: (0, 0, 0)),
                pl.BlockSpec((K, C_out, C_in), lambda g: (0, 0, 0)),
                pl.BlockSpec((C_out, 1), lambda g: (0, 0)),
            ],
            out_specs=pl.BlockSpec((nb, C_out, Lout_pad), lambda g: (g, 0, 0)),
        ),
        compiler_params=pltpu.CompilerParams(
            dimension_semantics=("parallel",)),
    )(x_flat, w1k, w2k, shift)

    # Epilogue: in the common "same" case (Lout_pad == H1*W and W2o == W) this
    # is a single free reshape - no crop/copy pass over the output.
    out = out_flat if Lout_pad == Lout else out_flat[:, :, :Lout]
    out = out.reshape(N, C_out, H1, W)
    if W2o != W:
        out = out[:, :, :, :W2o]
    return out


if __name__ == "__main__":
    key = jax.random.PRNGKey(0)
    k1, k2, k3, k4, k5, k6, k7 = jax.random.split(key, 7)

    N, C_in, C_out, H, W = 2, 4, 8, 16, 16
    K, stride, padding = 3, 1, 1

    x = jax.random.normal(k1, (N, C_in, H, W), jnp.float32)
    w1 = 0.3 * jax.random.normal(k2, (C_in, C_in, K, 1), jnp.float32)
    w2 = 0.3 * jax.random.normal(k3, (C_out, C_in, 1, K), jnp.float32)
    gamma = 1.0 + 0.1 * jax.random.normal(k4, (C_out,), jnp.float32)
    beta = 0.1 * jax.random.normal(k5, (C_out,), jnp.float32)
    r_mean = 0.1 * jax.random.normal(k6, (C_out,), jnp.float32)
    r_var = 1.0 + 0.5 * jax.random.uniform(k7, (C_out,), jnp.float32)

    out = fac_conv(x, w1, w2, gamma, beta, r_mean, r_var,
                   kernel_length=K, stride=stride, padding=padding)
    out = jax.block_until_ready(out)

    # Pure-JAX reference (same semantics as the PyTorch module in eval mode).
    eps = 1e-5
    xr = jnp.maximum(x, 0.0)
    y1 = jax.lax.conv_general_dilated(
        xr, w1, (stride, 1), ((padding, padding), (0, 0)),
        dimension_numbers=("NCHW", "OIHW", "NCHW"))
    y2 = jax.lax.conv_general_dilated(
        y1, w2, (1, stride), ((0, 0), (padding, padding)),
        dimension_numbers=("NCHW", "OIHW", "NCHW"))
    inv_std = 1.0 / jnp.sqrt(r_var + eps)
    ref = (y2 * (gamma * inv_std).reshape(1, C_out, 1, 1)
           + (beta - r_mean * gamma * inv_std).reshape(1, C_out, 1, 1))

    assert out.shape == ref.shape == (N, C_out, H, W)
    max_err = float(jnp.max(jnp.abs(out - ref)))
    if max_err > 2e-3:
        raise SystemExit(f"FacConv kernel mismatch: max abs err = {max_err}")
    print("KERNEL_OK")
</pallas_src>

<mosaic_0001>
module attributes {stable_mosaic.version = 11 : i64} {
  func.func @_facconv_kernel(%arg0: i32, %arg1: memref<1x4x256xf32, #tpu.memory_space<vmem>>, %arg2: memref<3x4x4xf32, #tpu.memory_space<vmem>>, %arg3: memref<3x8x4xf32, #tpu.memory_space<vmem>>, %arg4: memref<8x1xf32, #tpu.memory_space<vmem>>, %arg5: memref<1x8x256xf32, #tpu.memory_space<vmem>>) attributes {dimension_semantics = [#tpu.dimension_semantics<parallel>], iteration_bounds = array<i64: 2>, scalar_prefetch = 0 : i64, scratch_operands = 0 : i64, tpu.core_type = #tpu.core_type<tc>, window_params = [{transform_indices = @transform_0, window_bounds = array<i64: 1, 4, 256>}, {pipeline_mode = #tpu.pipeline_mode<synchronous>, transform_indices = @transform_1, window_bounds = array<i64: 3, 4, 4>}, {pipeline_mode = #tpu.pipeline_mode<synchronous>, transform_indices = @transform_2, window_bounds = array<i64: 3, 8, 4>}, {pipeline_mode = #tpu.pipeline_mode<synchronous>, transform_indices = @transform_3, window_bounds = array<i64: 8, 1>}, {transform_indices = @transform_4, window_bounds = array<i64: 1, 8, 256>}]} {
    %0 = tpu.iota {dimensions = array<i32: 1>} : vector<1x256xi32>
    %c16_i32 = arith.constant 16 : i32
    %c0_i32 = arith.constant 0 : i32
    %1 = arith.cmpi eq, %c16_i32, %c0_i32 : i32
    %c1_i32 = arith.constant 1 : i32
    %2 = arith.select %1, %c1_i32, %c16_i32 : i32
    %3 = vector.broadcast %2 : i32 to vector<1x256xi32>
    %4 = arith.remsi %0, %3 : vector<1x256xi32>
    %c0_i32_0 = arith.constant 0 : i32
    %5 = vector.broadcast %c0_i32_0 : i32 to vector<1x256xi32>
    %6 = arith.cmpi ne, %4, %5 : vector<1x256xi32>
    %c0_i32_1 = arith.constant 0 : i32
    %7 = vector.broadcast %c0_i32_1 : i32 to vector<1x256xi32>
    %8 = arith.cmpi slt, %4, %7 : vector<1x256xi32>
    %c0_i32_2 = arith.constant 0 : i32
    %9 = arith.cmpi slt, %2, %c0_i32_2 : i32
    %10 = vector.broadcast %9 : i1 to vector<1x256xi1>
    %11 = vector.broadcast %10 : vector<1x256xi1> to vector<1x256xi1>
    %12 = arith.xori %8, %11 : vector<1x256xi1>
    %13 = arith.andi %12, %6 : vector<1x256xi1>
    %14 = vector.broadcast %2 : i32 to vector<1x256xi32>
    %15 = arith.addi %4, %14 : vector<1x256xi32>
    %16 = arith.select %13, %15, %4 : vector<1x256xi1>, vector<1x256xi32>
    %c1_i32_3 = arith.constant 1 : i32
    %17 = vector.broadcast %c1_i32_3 : i32 to vector<1x256xi32>
    %18 = arith.cmpi sge, %16, %17 : vector<1x256xi32>
    %c17_i32 = arith.constant 17 : i32
    %19 = vector.broadcast %c17_i32 : i32 to vector<1x256xi32>
    %20 = arith.cmpi slt, %16, %19 : vector<1x256xi32>
    %21 = arith.andi %18, %20 : vector<1x256xi1>
    %c0_i32_4 = arith.constant 0 : i32
    %22 = vector.broadcast %c0_i32_4 : i32 to vector<1x256xi32>
    %23 = arith.cmpi sge, %16, %22 : vector<1x256xi32>
    %c16_i32_5 = arith.constant 16 : i32
    %24 = vector.broadcast %c16_i32_5 : i32 to vector<1x256xi32>
    %25 = arith.cmpi slt, %16, %24 : vector<1x256xi32>
    %26 = arith.andi %23, %25 : vector<1x256xi1>
    %c-1_i32 = arith.constant -1 : i32
    %27 = vector.broadcast %c-1_i32 : i32 to vector<1x256xi32>
    %28 = arith.cmpi sge, %16, %27 : vector<1x256xi32>
    %c15_i32 = arith.constant 15 : i32
    %29 = vector.broadcast %c15_i32 : i32 to vector<1x256xi32>
    %30 = arith.cmpi slt, %16, %29 : vector<1x256xi32>
    %31 = arith.andi %28, %30 : vector<1x256xi1>
    %c0 = arith.constant 0 : index
    %c0_6 = arith.constant 0 : index
    %c0_7 = arith.constant 0 : index
    %32 = vector.load %arg2[%c0, %c0_6, %c0_7] : memref<3x4x4xf32, #tpu.memory_space<vmem>>, vector<1x4x4xf32>
    %33 = vector.shape_cast %32 : vector<1x4x4xf32> to vector<4x4xf32>
    %c1 = arith.constant 1 : index
    %c0_8 = arith.constant 0 : index
    %c0_9 = arith.constant 0 : index
    %34 = vector.load %arg2[%c1, %c0_8, %c0_9] : memref<3x4x4xf32, #tpu.memory_space<vmem>>, vector<1x4x4xf32>
    %35 = vector.shape_cast %34 : vector<1x4x4xf32> to vector<4x4xf32>
    %c2 = arith.constant 2 : index
    %c0_10 = arith.constant 0 : index
    %c0_11 = arith.constant 0 : index
    %36 = vector.load %arg2[%c2, %c0_10, %c0_11] : memref<3x4x4xf32, #tpu.memory_space<vmem>>, vector<1x4x4xf32>
    %37 = vector.shape_cast %36 : vector<1x4x4xf32> to vector<4x4xf32>
    %c0_12 = arith.constant 0 : index
    %c0_13 = arith.constant 0 : index
    %c0_14 = arith.constant 0 : index
    %38 = vector.load %arg3[%c0_12, %c0_13, %c0_14] : memref<3x8x4xf32, #tpu.memory_space<vmem>>, vector<1x8x4xf32>
    %39 = vector.shape_cast %38 : vector<1x8x4xf32> to vector<8x4xf32>
    %c1_15 = arith.constant 1 : index
    %c0_16 = arith.constant 0 : index
    %c0_17 = arith.constant 0 : index
    %40 = vector.load %arg3[%c1_15, %c0_16, %c0_17] : memref<3x8x4xf32, #tpu.memory_space<vmem>>, vector<1x8x4xf32>
    %41 = vector.shape_cast %40 : vector<1x8x4xf32> to vector<8x4xf32>
    %c2_18 = arith.constant 2 : index
    %c0_19 = arith.constant 0 : index
    %c0_20 = arith.constant 0 : index
    %42 = vector.load %arg3[%c2_18, %c0_19, %c0_20] : memref<3x8x4xf32, #tpu.memory_space<vmem>>, vector<1x8x4xf32>
    %43 = vector.shape_cast %42 : vector<1x8x4xf32> to vector<8x4xf32>
    %c0_21 = arith.constant 0 : index
    %c0_22 = arith.constant 0 : index
    %44 = vector.load %arg4[%c0_21, %c0_22] : memref<8x1xf32, #tpu.memory_space<vmem>>, vector<8x1xf32>
    %cst = arith.constant 0.000000e+00 : f32
    %45 = vector.broadcast %cst : f32 to vector<4x17xf32>
    %cst_23 = arith.constant 0.000000e+00 : f32
    %46 = vector.broadcast %cst_23 : f32 to vector<4x17xf32>
    %c0_24 = arith.constant 0 : index
    %c0_25 = arith.constant 0 : index
    %c0_26 = arith.constant 0 : index
    %47 = vector.load %arg1[%c0_24, %c0_25, %c0_26] : memref<1x4x256xf32, #tpu.memory_space<vmem>>, vector<1x4x256xf32>
    %48 = vector.shape_cast %47 : vector<1x4x256xf32> to vector<4x256xf32>
    %cst_27 = arith.constant 0.000000e+00 : f32
    %49 = vector.broadcast %cst_27 : f32 to vector<4x256xf32>
    %50 = arith.maximumf %48, %49 : vector<4x256xf32>
    %51 = tpu.concatenate %45, %50, %46 in 1 : vector<4x17xf32>, vector<4x256xf32>, vector<4x17xf32> -> vector<4x290xf32>
    %52 = vector.extract_strided_slice %51 {offsets = [0, 0], sizes = [4, 258], strides = [1, 1]} : vector<4x290xf32> to vector<4x258xf32>
    %cst_28 = arith.constant dense<0.000000e+00> : vector<4x258xf32>
    %53 = tpu.matmul %33, %52, %cst_28 {dimension_numbers = #tpu.dot_dimension_numbers<[1], [0], [0], [1], [0, 0, 1, 1], [], []>} : vector<4x4xf32>, vector<4x258xf32>, vector<4x258xf32> -> vector<4x258xf32>
    %54 = vector.extract_strided_slice %51 {offsets = [0, 16], sizes = [4, 258], strides = [1, 1]} : vector<4x290xf32> to vector<4x258xf32>
    %cst_29 = arith.constant dense<0.000000e+00> : vector<4x258xf32>
    %55 = tpu.matmul %35, %54, %cst_29 {dimension_numbers = #tpu.dot_dimension_numbers<[1], [0], [0], [1], [0, 0, 1, 1], [], []>} : vector<4x4xf32>, vector<4x258xf32>, vector<4x258xf32> -> vector<4x258xf32>
    %56 = arith.addf %53, %55 : vector<4x258xf32>
    %57 = vector.extract_strided_slice %51 {offsets = [0, 32], sizes = [4, 258], strides = [1, 1]} : vector<4x290xf32> to vector<4x258xf32>
    %cst_30 = arith.constant dense<0.000000e+00> : vector<4x258xf32>
    %58 = tpu.matmul %37, %57, %cst_30 {dimension_numbers = #tpu.dot_dimension_numbers<[1], [0], [0], [1], [0, 0, 1, 1], [], []>} : vector<4x4xf32>, vector<4x258xf32>, vector<4x258xf32> -> vector<4x258xf32>
    %59 = arith.addf %56, %58 : vector<4x258xf32>
    %60 = vector.extract_strided_slice %59 {offsets = [0, 0], sizes = [4, 256], strides = [1, 1]} : vector<4x258xf32> to vector<4x256xf32>
    %cst_31 = arith.constant 0.000000e+00 : f32
    %61 = vector.shape_cast %21 : vector<1x256xi1> to vector<1x256xi1>
    %62 = vector.broadcast %61 : vector<1x256xi1> to vector<4x256xi1>
    %63 = vector.broadcast %cst_31 : f32 to vector<4x256xf32>
    %64 = arith.select %62, %60, %63 : vector<4x256xi1>, vector<4x256xf32>
    %cst_32 = arith.constant dense<0.000000e+00> : vector<8x256xf32>
    %65 = tpu.matmul %39, %64, %cst_32 {dimension_numbers = #tpu.dot_dimension_numbers<[1], [0], [0], [1], [0, 0, 1, 1], [], []>} : vector<8x4xf32>, vector<4x256xf32>, vector<8x256xf32> -> vector<8x256xf32>
    %66 = vector.extract_strided_slice %59 {offsets = [0, 1], sizes = [4, 256], strides = [1, 1]} : vector<4x258xf32> to vector<4x256xf32>
    %cst_33 = arith.constant 0.000000e+00 : f32
    %67 = vector.shape_cast %26 : vector<1x256xi1> to vector<1x256xi1>
    %68 = vector.broadcast %67 : vector<1x256xi1> to vector<4x256xi1>
    %69 = vector.broadcast %cst_33 : f32 to vector<4x256xf32>
    %70 = arith.select %68, %66, %69 : vector<4x256xi1>, vector<4x256xf32>
    %cst_34 = arith.constant dense<0.000000e+00> : vector<8x256xf32>
    %71 = tpu.matmul %41, %70, %cst_34 {dimension_numbers = #tpu.dot_dimension_numbers<[1], [0], [0], [1], [0, 0, 1, 1], [], []>} : vector<8x4xf32>, vector<4x256xf32>, vector<8x256xf32> -> vector<8x256xf32>
    %72 = arith.addf %65, %71 : vector<8x256xf32>
    %73 = vector.extract_strided_slice %59 {offsets = [0, 2], sizes = [4, 256], strides = [1, 1]} : vector<4x258xf32> to vector<4x256xf32>
    %cst_35 = arith.constant 0.000000e+00 : f32
    %74 = vector.shape_cast %31 : vector<1x256xi1> to vector<1x256xi1>
    %75 = vector.broadcast %74 : vector<1x256xi1> to vector<4x256xi1>
    %76 = vector.broadcast %cst_35 : f32 to vector<4x256xf32>
    %77 = arith.select %75, %73, %76 : vector<4x256xi1>, vector<4x256xf32>
    %cst_36 = arith.constant dense<0.000000e+00> : vector<8x256xf32>
    %78 = tpu.matmul %43, %77, %cst_36 {dimension_numbers = #tpu.dot_dimension_numbers<[1], [0], [0], [1], [0, 0, 1, 1], [], []>} : vector<8x4xf32>, vector<4x256xf32>, vector<8x256xf32> -> vector<8x256xf32>
    %79 = arith.addf %72, %78 : vector<8x256xf32>
    %80 = vector.broadcast %44 : vector<8x1xf32> to vector<8x256xf32>
    %81 = arith.addf %79, %80 : vector<8x256xf32>
    %c0_37 = arith.constant 0 : index
    %c0_38 = arith.constant 0 : index
    %c0_39 = arith.constant 0 : index
    %82 = vector.load %arg5[%c0_37, %c0_38, %c0_39] : memref<1x8x256xf32, #tpu.memory_space<vmem>>, vector<1x8x256xf32>
    %83 = vector.shape_cast %82 : vector<1x8x256xf32> to vector<8x256xf32>
    %84 = vector.shape_cast %81 : vector<8x256xf32> to vector<1x8x256xf32>
    tpu.vector_store %arg5[%c0_37, %c0_38, %c0_39], %84 {strides = array<i32>} : memref<1x8x256xf32, #tpu.memory_space<vmem>>, vector<1x8x256xf32>,
    return
  }
  func.func @transform_0(%arg0: i32) -> (i32, i32, i32) {
    %c0_i32 = arith.constant 0 : i32
    %c0_i32_0 = arith.constant 0 : i32
    %c0_i32_1 = arith.constant 0 : i32
    return %arg0, %c0_i32, %c0_i32_0 : i32, i32, i32
  }
  func.func @transform_1(%arg0: i32) -> (i32, i32, i32) {
    %c0_i32 = arith.constant 0 : i32
    %c0_i32_0 = arith.constant 0 : i32
    %c0_i32_1 = arith.constant 0 : i32
    %c0_i32_2 = arith.constant 0 : i32
    return %c0_i32, %c0_i32_0, %c0_i32_1 : i32, i32, i32
  }
  func.func @transform_2(%arg0: i32) -> (i32, i32, i32) {
    %c0_i32 = arith.constant 0 : i32
    %c0_i32_0 = arith.constant 0 : i32
    %c0_i32_1 = arith.constant 0 : i32
    %c0_i32_2 = arith.constant 0 : i32
    return %c0_i32, %c0_i32_0, %c0_i32_1 : i32, i32, i32
  }
  func.func @transform_3(%arg0: i32) -> (i32, i32) {
    %c0_i32 = arith.constant 0 : i32
    %c0_i32_0 = arith.constant 0 : i32
    %c0_i32_1 = arith.constant 0 : i32
    return %c0_i32, %c0_i32_0 : i32, i32
  }
  func.func @transform_4(%arg0: i32) -> (i32, i32, i32) {
    %c0_i32 = arith.constant 0 : i32
    %c0_i32_0 = arith.constant 0 : i32
    %c0_i32_1 = arith.constant 0 : i32
    return %arg0, %c0_i32, %c0_i32_0 : i32, i32, i32
  }
}

</mosaic_0001>

<llo_original>
// kernel: tpu_custom_call.1
$region0: #{tpu_custom_call.1}
  #allocation0 [shape = 'u32[]', space=smem, size = 0x4, offset = 0x4, fixed_abs, tag = 'smem constant byte address 0x4 - core index']
  #allocation1 [shape = 'u32[144,128]{1,0:T(1,128)}', space=vmem, size = 0x12000, scoped, tag = 'internal scratch']
  %s0 = inlined_call_operand.vmem [shape: f32[2,4,256], index: 0, kind: input, shape index: {}]
  %s1 = inlined_call_operand.vmem [shape: f32[3,4,4], index: 1, kind: input, shape index: {}]
  %s2 = inlined_call_operand.vmem [shape: f32[3,8,4], index: 2, kind: input, shape index: {}]
  %s3 = inlined_call_operand.vmem [shape: f32[8,1], index: 3, kind: input, shape index: {}]
  %s4 = inlined_call_operand.hbm [shape: f32[2,8,256], index: 4, kind: output, shape index: {}]
  %s5 = sld [smem:[#allocation0]]
  $region49: #{tpu_custom_call.1} parent=0
    _
  %s7 = ssub.s32 1, %s5
  %s8 = scalar_select 0, %s7, %s5
  $region1: #{tpu_custom_call.1} parent=0
    #allocation2 [shape = 'u8[16384]{0}', space=vmem, size = 0x4000, scoped, tag = 'output window, operand 0']
    #allocation3 [shape = 's32[2]{0}', space=sflag, size = 0x8, scoped, tag = 'scoped memory for tpu_custom_call.1']
    %9 = vsyncpa [#allocation3], 0
    %s10 = scalar_lea.sflag [#allocation3], 1
    %11 = vsyncpa %s10, 0
    loop: start=0, step=1, limit=4
    $region2: #{tpu_custom_call.1} parent=1 // loop_pre_header
      _
    $region3: #{tpu_custom_call.1} parent=1 // loop_header
      %s13 = sphi 0, %s17
      %p14 = scmp.ge.s32.totalorder %s13, 4
      %s23 = sphi 0, %s25
      %s26 = sphi 0, %s23
      %s27 = sphi 0, %s26
      %s43 = sphi 0, %s27
      %s47 = sphi 0, %s47
      %s49 = sphi 0, %s47
      %s50 = sphi 0, %s49
      %s64 = sphi 0, %s50
      %s68 = sphi 0, %s68
      %s70 = sphi 0, %s68
      %s71 = sphi 0, %s70
      %s85 = sphi 0, %s71
      %s89 = sphi 0, %s89
      %s91 = sphi 0, %s89
      %s92 = sphi 0, %s91
      %s106 = sphi 0, %s92
      %s112 = sphi 0, %s114
      %s115 = sphi 0, %s112
      %s116 = sphi 0, %s115
      %s132 = sphi 0, %s116
    $region4: #{tpu_custom_call.1} parent=1 // loop_header_branch
      %16 = sbr.rel (%p14) target = $region8
    $region5: #{tpu_custom_call.1} parent=1 // loop_body
      %s18 = ssub.s32 %s13, 1
      %s19 = ssub.s32 %s13, 2
      %s20 = sadd.s32 %s13, 1
      %s21 = ssub.s32 %s13, %s20
      %p22 = scmp.eq.s32.totalorder %s21, 0
      %s24 = sadd.s32 %s23, 1
      %s25 = scalar_select %p22, %s23, %s24
      %p28 = pneg %p22
      %p29 = scmp.eq.s32.totalorder %s13, 1
      %p30 = por %p28, %p29
      %p31 = scmp.ne.s32.totalorder %s23, %s26
      %p32 = scmp.eq.s32.totalorder %s13, 0
      %p33 = por %p31, %p32
      %p34 = scmp.ne.s32.totalorder %s23, %s26
      %p35 = scmp.eq.s32.totalorder %s18, 1
      %p36 = por %p34, %p35
      %p37 = scmp.ne.s32.totalorder %s26, %s27
      %p38 = scmp.eq.s32.totalorder %s18, 0
      %p39 = por %p37, %p38
      %p40 = scmp.ne.s32.totalorder %s26, %s27
      %p41 = scmp.eq.s32.totalorder %s19, 1
      %p42 = por %p40, %p41
      %p44 = scmp.ne.s32.totalorder %s27, %s43
      %p45 = scmp.eq.s32.totalorder %s19, 0
      %p46 = por %p44, %p45
      %s48 = sadd.s32 %s47, 1
      %p51 = scmp.eq.s32.totalorder %s13, 1
      %p52 = scmp.ne.s32.totalorder %s47, %s49
      %p53 = scmp.eq.s32.totalorder %s13, 0
      %p54 = por %p52, %p53
      %p55 = scmp.ne.s32.totalorder %s47, %s49
      %p56 = scmp.eq.s32.totalorder %s18, 1
      %p57 = por %p55, %p56
      %p58 = scmp.ne.s32.totalorder %s49, %s50
      %p59 = scmp.eq.s32.totalorder %s18, 0
      %p60 = por %p58, %p59
      %p61 = scmp.ne.s32.totalorder %s49, %s50
      %p62 = scmp.eq.s32.totalorder %s19, 1
      %p63 = por %p61, %p62
      %p65 = scmp.ne.s32.totalorder %s50, %s64
      %p66 = scmp.eq.s32.totalorder %s19, 0
      %p67 = por %p65, %p66
      %s69 = sadd.s32 %s68, 1
      %p72 = scmp.eq.s32.totalorder %s13, 1
      %p73 = scmp.ne.s32.totalorder %s68, %s70
      %p74 = scmp.eq.s32.totalorder %s13, 0
      %p75 = por %p73, %p74
      %p76 = scmp.ne.s32.totalorder %s68, %s70
      %p77 = scmp.eq.s32.totalorder %s18, 1
      %p78 = por %p76, %p77
      %p79 = scmp.ne.s32.totalorder %s70, %s71
      %p80 = scmp.eq.s32.totalorder %s18, 0
      %p81 = por %p79, %p80
      %p82 = scmp.ne.s32.totalorder %s70, %s71
      %p83 = scmp.eq.s32.totalorder %s19, 1
      %p84 = por %p82, %p83
      %p86 = scmp.ne.s32.totalorder %s71, %s85
      %p87 = scmp.eq.s32.totalorder %s19, 0
      %p88 = por %p86, %p87
      %s90 = sadd.s32 %s89, 1
      %p93 = scmp.eq.s32.totalorder %s13, 1
      %p94 = scmp.ne.s32.totalorder %s89, %s91
      %p95 = scmp.eq.s32.totalorder %s13, 0
      %p96 = por %p94, %p95
      %p97 = scmp.ne.s32.totalorder %s89, %s91
      %p98 = scmp.eq.s32.totalorder %s18, 1
      %p99 = por %p97, %p98
      %p100 = scmp.ne.s32.totalorder %s91, %s92
      %p101 = scmp.eq.s32.totalorder %s18, 0
      %p102 = por %p100, %p101
      %p103 = scmp.ne.s32.totalorder %s91, %s92
      %p104 = scmp.eq.s32.totalorder %s19, 1
      %p105 = por %p103, %p104
      %p107 = scmp.ne.s32.totalorder %s92, %s106
      %p108 = scmp.eq.s32.totalorder %s19, 0
      %p109 = por %p107, %p108
      %s110 = ssub.s32 %s13, %s20
      %p111 = scmp.eq.s32.totalorder %s110, 0
      %s113 = sadd.s32 %s112, 1
      %s114 = scalar_select %p111, %s112, %s113
      %p117 = pneg %p111
      %p118 = scmp.eq.s32.totalorder %s13, 1
      %p119 = por %p117, %p118
      %p120 = scmp.ne.s32.totalorder %s112, %s115
      %p121 = scmp.eq.s32.totalorder %s13, 0
      %p122 = por %p120, %p121
      %p123 = scmp.ne.s32.totalorder %s112, %s115
      %p124 = scmp.eq.s32.totalorder %s18, 1
      %p125 = por %p123, %p124
      %p126 = scmp.ne.s32.totalorder %s115, %s116
      %p127 = scmp.eq.s32.totalorder %s18, 0
      %p128 = por %p126, %p127
      %p129 = scmp.ne.s32.totalorder %s115, %s116
      %p130 = scmp.eq.s32.totalorder %s19, 1
      %p131 = por %p129, %p130
      %p133 = scmp.ne.s32.totalorder %s116, %s132
      %p134 = scmp.eq.s32.totalorder %s19, 0
      %p135 = por %p133, %p134
      %p136 = scmp.le.s32.totalorder 1, %s13
      %p137 = scmp.lt.s32.totalorder %s13, 3
      %p138 = pnand %p136, %p137
      %p139 = pneg %p138
      // Predicated region
      $region9: #{tpu_custom_call.1} parent=5 // pred_check
        _
      $region10: #{tpu_custom_call.1} parent=5 // pred_check_branch
        %141 = sbr.rel (%p138) target = $region12
      $region11: #{tpu_custom_call.1} parent=5 // pred_region
        %s142 = ssub.s32 %s13, 1
        // Predicated region
        $region13: #{tpu_custom_call.1} parent=11 // pred_check
          %p143 = pneg %p60
        $region14: #{tpu_custom_call.1} parent=11 // pred_check_branch
          %145 = sbr.rel (%p143) target = $region16
        $region15: #{tpu_custom_call.1} parent=11 // pred_region
          _
        $region16: #{tpu_custom_call.1} parent=11 // pred_fallthru
          _
        // Predicated region
        $region17: #{tpu_custom_call.1} parent=11 // pred_check
          %p146 = pneg %p81
        $region18: #{tpu_custom_call.1} parent=11 // pred_check_branch
          %148 = sbr.rel (%p146) target = $region20
        $region19: #{tpu_custom_call.1} parent=11 // pred_region
          _
        $region20: #{tpu_custom_call.1} parent=11 // pred_fallthru
          _
        // Predicated region
        $region21: #{tpu_custom_call.1} parent=11 // pred_check
          %p149 = pneg %p102
        $region22: #{tpu_custom_call.1} parent=11 // pred_check_branch
          %151 = sbr.rel (%p149) target = $region24
        $region23: #{tpu_custom_call.1} parent=11 // pred_region
          _
        $region24: #{tpu_custom_call.1} parent=11 // pred_fallthru
          _
      $region12: #{tpu_custom_call.1} parent=5 // pred_fallthru
        _
      %p152 = scmp.lt.s32.totalorder %s13, 2
      // Predicated region
      $region25: #{tpu_custom_call.1} parent=5 // pred_check
        %p153 = pneg %p152
      $region26: #{tpu_custom_call.1} parent=5 // pred_check_branch
        %155 = sbr.rel (%p153) target = $region28
      $region27: #{tpu_custom_call.1} parent=5 // pred_region
        // Predicated region
        $region29: #{tpu_custom_call.1} parent=27 // pred_check
          %p156 = pneg %p33
        $region30: #{tpu_custom_call.1} parent=27 // pred_check_branch
          %158 = sbr.rel (%p156) target = $region32
        $region31: #{tpu_custom_call.1} parent=27 // pred_region
          %p159 = scmp.lt.s32.totalorder %s13, 1
          %s160 = scalar_select %p159, %s13, 1
          %s161 = smul.addr %s160, 2
          %s162 = smul.addr %s161, 4
          %s163 = scalar_lea.vmem %s0, %s162
        $region32: #{tpu_custom_call.1} parent=27 // pred_fallthru
          _
      $region28: #{tpu_custom_call.1} parent=5 // pred_fallthru
        _
      %p164 = scmp.le.s32.totalorder 1, %s13
      %p165 = scmp.lt.s32.totalorder %s13, 3
      %p166 = pnand %p164, %p165
      %p167 = pneg %p166
      // Predicated region
      $region33: #{tpu_custom_call.1} parent=5 // pred_check
        _
      $region34: #{tpu_custom_call.1} parent=5 // pred_check_branch
        %169 = sbr.rel (%p166) target = $region36
      $region35: #{tpu_custom_call.1} parent=5 // pred_region
        %s170 = ssub.s32 %s13, 1
        %p171 = scmp.lt.s32.totalorder %s18, 1
        %s172 = scalar_select %p171, %s18, 1
        %s173 = smul.addr %s172, 2
        %s174 = smul.addr %s173, 4
        %s175 = scalar_lea.vmem %s0, %s174
        %p176 = pneg %p39
        %p177 = pneg %p36
        %p178 = pneg %p60
        %p179 = pneg %p57
        %p180 = pneg %p81
        %p181 = pneg %p78
        %p182 = pneg %p102
        %p183 = pneg %p99
        %p184 = pneg %p128
        %p185 = pneg %p125
        %s186 = sand.u32 %s115, 1
        %s187 = scalar_lea.sflag [#allocation3], %s186
        %s188 = sand.u32 %s115, 1
        %s189 = smul.addr %s188, 16
        %s190 = scalar_lea.vmem [#allocation2], %s189
        %p191 = scmp.lt.s32.totalorder %s18, 1
        %s192 = scalar_select %p191, %s18, 1
        %s193 = smul.addr %s192, 2
        %s194 = smul.addr %s193, 4
        %s195 = scalar_lea.vmem %s0, %s194
        %v196 = vlaneseq
        %v197 = vand.u32 %v196, 127
        %v198 = vadd.s32 %v197, 128
        %vm199 = vcmp.lt.s32.totalorder %v197, 0
        %v200 = vsub.s32 0, %v197
        %v201 = vsel %vm199, %v200, %v197
        %v202 = vshrl.u32 %v201, 4
        %v203 = vand.u32 %v201, 15
        %v204 = vsub.s32 0, %v203
        %v205 = vsel %vm199, %v204, %v203
        %vm206 = vcmp.lt.s32.totalorder %v198, 0
        %v207 = vsub.s32 0, %v198
        %v208 = vsel %vm206, %v207, %v198
        %v209 = vshrl.u32 %v208, 4
        %v210 = vand.u32 %v208, 15
        %v211 = vsub.s32 0, %v210
        %v212 = vsel %vm206, %v211, %v210
        %vm213 = vcmp.ne.s32.totalorder %v205, 0
        %vm214 = vcmp.ne.s32.totalorder %v212, 0
        %vm215 = vcmp.lt.s32.totalorder %v205, 0
        %vm216 = vcmp.lt.s32.totalorder %v212, 0
        %vm217 = vmand %vm215, %vm213
        %vm218 = vmand %vm216, %vm214
        %v219 = vadd.s32 %v205, 16
        %v220 = vadd.s32 %v212, 16
        %v221 = vsel %vm217, %v219, %v205
        %v222 = vsel %vm218, %v220, %v212
        %vm223 = vcmp.ge.s32.totalorder %v221, 1
        %vm224 = vcmp.ge.s32.totalorder %v222, 1
        %vm225 = vcmp.lt.s32.totalorder %v221, 17
        %vm226 = vcmp.lt.s32.totalorder %v222, 17
        %vm227 = vmand %vm223, %vm225
        %vm228 = vmand %vm224, %vm226
        %vm229 = vcmp.ge.s32.totalorder %v221, 0
        %vm230 = vcmp.ge.s32.totalorder %v222, 0
        %vm231 = vcmp.lt.s32.totalorder %v221, 16
        %vm232 = vcmp.lt.s32.totalorder %v222, 16
        %vm233 = vmand %vm229, %vm231
        %vm234 = vmand %vm230, %vm232
        %vm235 = vcmp.ge.s32.totalorder %v221, 4294967295
        %vm236 = vcmp.ge.s32.totalorder %v222, 4294967295
        %vm237 = vcmp.lt.s32.totalorder %v221, 15
        %vm238 = vcmp.lt.s32.totalorder %v222, 15
        %vm239 = vmand %vm235, %vm237
        %vm240 = vmand %vm236, %vm238
        %v241 = vld [vmem:[%s1] sm:$0xf]
        %s242 = scalar_lea.vmem %s1, 4
        %v243 = vld [vmem:[%s242] sm:$0xf]
        %s244 = scalar_lea.vmem %s1, 8
        %v245 = vld [vmem:[%s244] sm:$0xf]
        %v246 = vld [vmem:[%s2] sm:$0xff]
        %s247 = scalar_lea.vmem %s2, 8
        %v248 = vld [vmem:[%s247] sm:$0xff]
        %s249 = scalar_lea.vmem %s2, 16
        %v250 = vld [vmem:[%s249] sm:$0xff]
        %v251 = vld [vmem:[%s3] sm:$0xff]
        %v252 = vld [vmem:[%s195] sm:$0xff]
        %v253 = vmax.f32 %v252, 0.0
        %v255 = vcombine.high %v253, %v253
        %256 = vrot.lane.b32.xlu0 %v253, 17
        %v257 = vpop.permute.xlu0 %256
        %258 = vrot.lane.b32.xlu0 %v255, 17
        %v259 = vpop.permute.xlu0 %258
        %vm260 = vcmask 138240
        %v261 = vsel %vm260, %v257, %v259
        %v264 = vsel %vm260, 0.0, %v257
        %v265 = vsel %vm260, %v259, 0.0
        %268 = vrot.lane.b32.xlu0 %v264, 112
        %v269 = vpop.permute.xlu0 %268
        %270 = vrot.lane.b32.xlu0 %v261, 112
        %v271 = vpop.permute.xlu0 %270
        %272 = vrot.lane.b32.xlu0 %v265, 112
        %v273 = vpop.permute.xlu0 %272
        %vm274 = vcmask 916480
        %v275 = vsel %vm274, %v269, %v271
        %v276 = vsel %vm274, %v271, %v273
        %vm277 = vcmask 31744
        %v279 = vsel %vm277, %v243, 0
        %vm281 = vcmask 1043456
        %v282 = vsel %vm281, %v275, 0
        %v284 = vsel %vm281, %v276, 0
        %v286 = vsel %vm281, %v273, 0
        %288 = vmatprep.subr.mxu0 %v284
        %289 = vmatpush1.msra.mxu0 %v282
        %290 = vmatprep.subr.mxu0 0.0
        %291 = vmatpush1.msra.mxu0 0.0
        %292 = vmatprep.subr.mxu0 0.0
        %293 = vmatpush1.msra.mxu0 0.0
        %294 = vmatprep.subr.mxu0 0.0
        %295 = vmatpush1.msra.mxu0 0.0
        %296 = vmatprep.subr.mxu0 0.0
        %297 = vmatpush1.msra.mxu0 0.0
        %298 = vmatprep.subr.mxu0 0.0
        %299 = vmatpush1.msra.mxu0 0.0
        %300 = vmatprep.subr.mxu0 0.0
        %301 = vmatpush1.msra.mxu0 0.0
        %302 = vmatprep.subr.mxu0 0.0
        %303 = vmatpush1.msra.mxu0 0.0
        %304 = vmatprep.subr.mxu0 0.0
        %305 = vmatpush1.msra.mxu0 0.0
        %306 = vmatprep.subr.mxu0 0.0
        %307 = vmatpush1.msra.mxu0 0.0
        %308 = vmatprep.subr.mxu0 0.0
        %309 = vmatpush1.msra.mxu0 0.0
        %310 = vmatprep.subr.mxu0 0.0
        %311 = vmatpush1.msra.mxu0 0.0
        %312 = vmatprep.subr.mxu0 0.0
        %313 = vmatpush1.msra.mxu0 0.0
        %314 = vmatprep.subr.mxu0 0.0
        %315 = vmatpush1.msra.mxu0 0.0
        %316 = vmatprep.subr.mxu0 0.0
        %317 = vmatpush1.msra.mxu0 0.0
        %318 = vmatprep.subr.mxu0 0.0
        %319 = vmatpush1.msra.mxu0 0.0
        %320 = vmatprep.subr.mxu0 0.0
        %321 = vmatpush1.msra.mxu0 0.0
        %322 = vmatprep.subr.mxu0 0.0
        %323 = vmatpush1.msra.mxu0 0.0
        %324 = vmatprep.subr.mxu0 0.0
        %325 = vmatpush1.msra.mxu0 0.0
        %326 = vmatprep.subr.mxu0 0.0
        %327 = vmatpush1.msra.mxu0 0.0
        %328 = vmatprep.subr.mxu0 0.0
        %329 = vmatpush1.msra.mxu0 0.0
        %330 = vmatprep.subr.mxu0 0.0
        %331 = vmatpush1.msra.mxu0 0.0
        %332 = vmatprep.subr.mxu0 0.0
        %333 = vmatpush1.msra.mxu0 0.0
        %334 = vmatprep.subr.mxu0 0.0
        %335 = vmatpush1.msra.mxu0 0.0
        %336 = vmatprep.subr.mxu0 0.0
        %337 = vmatpush1.msra.mxu0 0.0
        %338 = vmatprep.subr.mxu0 0.0
        %339 = vmatpush1.msra.mxu0 0.0
        %340 = vmatprep.subr.mxu0 0.0
        %341 = vmatpush1.msra.mxu0 0.0
        %342 = vmatprep.subr.mxu0 0.0
        %343 = vmatpush1.msra.mxu0 0.0
        %344 = vmatprep.subr.mxu0 0.0
        %345 = vmatpush1.msra.mxu0 0.0
        %346 = vmatprep.subr.mxu0 0.0
        %347 = vmatpush1.msra.mxu0 0.0
        %348 = vmatprep.subr.mxu0 0.0
        %349 = vmatpush1.msra.mxu0 0.0
        %350 = vmatprep.subr.mxu0 0.0
        %351 = vmatpush1.msra.mxu0 0.0
        %352 = vmatprep.mubr.f32.mxu0 0.0
        %353 = vmatmul.mubr.f32.gmra.mrb[0].mxu0 %v279
        %v354 = vpop.f32.mrb[0].mxu0
        %v355 = vadd.f32 0.0, %v354
        %v356 = vpop.f32.mrb[0].mxu0
        %v357 = vadd.f32 0.0, %v356
        %358 = vdwg.mxu0
        %359 = vmatprep.subr.mxu0 0.0
        %360 = vmatpush1.msra.mxu0 %v286
        %361 = vmatprep.subr.mxu0 0.0
        %362 = vmatpush1.msra.mxu0 0.0
        %363 = vmatprep.subr.mxu0 0.0
        %364 = vmatpush1.msra.mxu0 0.0
        %365 = vmatprep.subr.mxu0 0.0
        %366 = vmatpush1.msra.mxu0 0.0
        %367 = vmatprep.subr.mxu0 0.0
        %368 = vmatpush1.msra.mxu0 0.0
        %369 = vmatprep.subr.mxu0 0.0
        %370 = vmatpush1.msra.mxu0 0.0
        %371 = vmatprep.subr.mxu0 0.0
        %372 = vmatpush1.msra.mxu0 0.0
        %373 = vmatprep.subr.mxu0 0.0
        %374 = vmatpush1.msra.mxu0 0.0
        %375 = vmatprep.subr.mxu0 0.0
        %376 = vmatpush1.msra.mxu0 0.0
        %377 = vmatprep.subr.mxu0 0.0
        %378 = vmatpush1.msra.mxu0 0.0
        %379 = vmatprep.subr.mxu0 0.0
        %380 = vmatpush1.msra.mxu0 0.0
        %381 = vmatprep.subr.mxu0 0.0
        %382 = vmatpush1.msra.mxu0 0.0
        %383 = vmatprep.subr.mxu0 0.0
        %384 = vmatpush1.msra.mxu0 0.0
        %385 = vmatprep.subr.mxu0 0.0
        %386 = vmatpush1.msra.mxu0 0.0
        %387 = vmatprep.subr.mxu0 0.0
        %388 = vmatpush1.msra.mxu0 0.0
        %389 = vmatprep.subr.mxu0 0.0
        %390 = vmatpush1.msra.mxu0 0.0
        %391 = vmatprep.subr.mxu0 0.0
        %392 = vmatpush1.msra.mxu0 0.0
        %393 = vmatprep.subr.mxu0 0.0
        %394 = vmatpush1.msra.mxu0 0.0
        %395 = vmatprep.subr.mxu0 0.0
        %396 = vmatpush1.msra.mxu0 0.0
        %397 = vmatprep.subr.mxu0 0.0
        %398 = vmatpush1.msra.mxu0 0.0
        %399 = vmatprep.subr.mxu0 0.0
        %400 = vmatpush1.msra.mxu0 0.0
        %401 = vmatprep.subr.mxu0 0.0
        %402 = vmatpush1.msra.mxu0 0.0
        %403 = vmatprep.subr.mxu0 0.0
        %404 = vmatpush1.msra.mxu0 0.0
        %405 = vmatprep.subr.mxu0 0.0
        %406 = vmatpush1.msra.mxu0 0.0
        %407 = vmatprep.subr.mxu0 0.0
        %408 = vmatpush1.msra.mxu0 0.0
        %409 = vmatprep.subr.mxu0 0.0
        %410 = vmatpush1.msra.mxu0 0.0
        %411 = vmatprep.subr.mxu0 0.0
        %412 = vmatpush1.msra.mxu0 0.0
        %413 = vmatprep.subr.mxu0 0.0
        %414 = vmatpush1.msra.mxu0 0.0
        %415 = vmatprep.subr.mxu0 0.0
        %416 = vmatpush1.msra.mxu0 0.0
        %417 = vmatprep.subr.mxu0 0.0
        %418 = vmatpush1.msra.mxu0 0.0
        %419 = vmatprep.subr.mxu0 0.0
        %420 = vmatpush1.msra.mxu0 0.0
        %421 = vmatprep.subr.mxu0 0.0
        %422 = vmatpush1.msra.mxu0 0.0
        %423 = vmatprep.mubr.f32.mxu0 0.0
        %424 = vmatmul.mubr.f32.gmra.mrb[0].mxu0 %v279
        %v425 = vpop.f32.mrb[0].mxu0
        %v426 = vadd.f32 0.0, %v425
        %v427 = vpop.f32.mrb[0].mxu0
        %428 = vdwg.mxu0
        %v430 = vsel %vm277, %v241, 0
        %v432 = vsel %vm281, %v264, 0
        %v434 = vsel %vm281, %v261, 0
        %v436 = vsel %vm281, %v265, 0
        %438 = vmatprep.subr.mxu0 %v434
        %439 = vmatpush1.msra.mxu0 %v432
        %440 = vmatprep.subr.mxu0 0.0
        %441 = vmatpush1.msra.mxu0 0.0
        %442 = vmatprep.subr.mxu0 0.0
        %443 = vmatpush1.msra.mxu0 0.0
        %444 = vmatprep.subr.mxu0 0.0
        %445 = vmatpush1.msra.mxu0 0.0
        %446 = vmatprep.subr.mxu0 0.0
        %447 = vmatpush1.msra.mxu0 0.0
        %448 = vmatprep.subr.mxu0 0.0
        %449 = vmatpush1.msra.mxu0 0.0
        %450 = vmatprep.subr.mxu0 0.0
        %451 = vmatpush1.msra.mxu0 0.0
        %452 = vmatprep.subr.mxu0 0.0
        %453 = vmatpush1.msra.mxu0 0.0
        %454 = vmatprep.subr.mxu0 0.0
        %455 = vmatpush1.msra.mxu0 0.0
        %456 = vmatprep.subr.mxu0 0.0
        %457 = vmatpush1.msra.mxu0 0.0
        %458 = vmatprep.subr.mxu0 0.0
        %459 = vmatpush1.msra.mxu0 0.0
        %460 = vmatprep.subr.mxu0 0.0
        %461 = vmatpush1.msra.mxu0 0.0
        %462 = vmatprep.subr.mxu0 0.0
        %463 = vmatpush1.msra.mxu0 0.0
        %464 = vmatprep.subr.mxu0 0.0
        %465 = vmatpush1.msra.mxu0 0.0
        %466 = vmatprep.subr.mxu0 0.0
        %467 = vmatpush1.msra.mxu0 0.0
        %468 = vmatprep.subr.mxu0 0.0
        %469 = vmatpush1.msra.mxu0 0.0
        %470 = vmatprep.subr.mxu0 0.0
        %471 = vmatpush1.msra.mxu0 0.0
        %472 = vmatprep.subr.mxu0 0.0
        %473 = vmatpush1.msra.mxu0 0.0
        %474 = vmatprep.subr.mxu0 0.0
        %475 = vmatpush1.msra.mxu0 0.0
        %476 = vmatprep.subr.mxu0 0.0
        %477 = vmatpush1.msra.mxu0 0.0
        %478 = vmatprep.subr.mxu0 0.0
        %479 = vmatpush1.msra.mxu0 0.0
        %480 = vmatprep.subr.mxu0 0.0
        %481 = vmatpush1.msra.mxu0 0.0
        %482 = vmatprep.subr.mxu0 0.0
        %483 = vmatpush1.msra.mxu0 0.0
        %484 = vmatprep.subr.mxu0 0.0
        %485 = vmatpush1.msra.mxu0 0.0
        %486 = vmatprep.subr.mxu0 0.0
        %487 = vmatpush1.msra.mxu0 0.0
        %488 = vmatprep.subr.mxu0 0.0
        %489 = vmatpush1.msra.mxu0 0.0
        %490 = vmatprep.subr.mxu0 0.0
        %491 = vmatpush1.msra.mxu0 0.0
        %492 = vmatprep.subr.mxu0 0.0
        %493 = vmatpush1.msra.mxu0 0.0
        %494 = vmatprep.subr.mxu0 0.0
        %495 = vmatpush1.msra.mxu0 0.0
        %496 = vmatprep.subr.mxu0 0.0
        %497 = vmatpush1.msra.mxu0 0.0
        %498 = vmatprep.subr.mxu0 0.0
        %499 = vmatpush1.msra.mxu0 0.0
        %500 = vmatprep.subr.mxu0 0.0
        %501 = vmatpush1.msra.mxu0 0.0
        %502 = vmatprep.mubr.f32.mxu0 0.0
        %503 = vmatmul.mubr.f32.gmra.mrb[0].mxu0 %v430
        %v504 = vpop.f32.mrb[0].mxu0
        %v505 = vadd.f32 %v355, %v504
        %v506 = vpop.f32.mrb[0].mxu0
        %v507 = vadd.f32 %v357, %v506
        %508 = vdwg.mxu0
        %509 = vmatprep.subr.mxu0 0.0
        %510 = vmatpush1.msra.mxu0 %v436
        %511 = vmatprep.subr.mxu0 0.0
        %512 = vmatpush1.msra.mxu0 0.0
        %513 = vmatprep.subr.mxu0 0.0
        %514 = vmatpush1.msra.mxu0 0.0
        %515 = vmatprep.subr.mxu0 0.0
        %516 = vmatpush1.msra.mxu0 0.0
        %517 = vmatprep.subr.mxu0 0.0
        %518 = vmatpush1.msra.mxu0 0.0
        %519 = vmatprep.subr.mxu0 0.0
        %520 = vmatpush1.msra.mxu0 0.0
        %521 = vmatprep.subr.mxu0 0.0
        %522 = vmatpush1.msra.mxu0 0.0
        %523 = vmatprep.subr.mxu0 0.0
        %524 = vmatpush1.msra.mxu0 0.0
        %525 = vmatprep.subr.mxu0 0.0
        %526 = vmatpush1.msra.mxu0 0.0
        %527 = vmatprep.subr.mxu0 0.0
        %528 = vmatpush1.msra.mxu0 0.0
        %529 = vmatprep.subr.mxu0 0.0
        %530 = vmatpush1.msra.mxu0 0.0
        %531 = vmatprep.subr.mxu0 0.0
        %532 = vmatpush1.msra.mxu0 0.0
        %533 = vmatprep.subr.mxu0 0.0
        %534 = vmatpush1.msra.mxu0 0.0
        %535 = vmatprep.subr.mxu0 0.0
        %536 = vmatpush1.msra.mxu0 0.0
        %537 = vmatprep.subr.mxu0 0.0
        %538 = vmatpush1.msra.mxu0 0.0
        %539 = vmatprep.subr.mxu0 0.0
        %540 = vmatpush1.msra.mxu0 0.0
        %541 = vmatprep.subr.mxu0 0.0
        %542 = vmatpush1.msra.mxu0 0.0
        %543 = vmatprep.subr.mxu0 0.0
        %544 = vmatpush1.msra.mxu0 0.0
        %545 = vmatprep.subr.mxu0 0.0
        %546 = vmatpush1.msra.mxu0 0.0
        %547 = vmatprep.subr.mxu0 0.0
        %548 = vmatpush1.msra.mxu0 0.0
        %549 = vmatprep.subr.mxu0 0.0
        %550 = vmatpush1.msra.mxu0 0.0
        %551 = vmatprep.subr.mxu0 0.0
        %552 = vmatpush1.msra.mxu0 0.0
        %553 = vmatprep.subr.mxu0 0.0
        %554 = vmatpush1.msra.mxu0 0.0
        %555 = vmatprep.subr.mxu0 0.0
        %556 = vmatpush1.msra.mxu0 0.0
        %557 = vmatprep.subr.mxu0 0.0
        %558 = vmatpush1.msra.mxu0 0.0
        %559 = vmatprep.subr.mxu0 0.0
        %560 = vmatpush1.msra.mxu0 0.0
        %561 = vmatprep.subr.mxu0 0.0
        %562 = vmatpush1.msra.mxu0 0.0
        %563 = vmatprep.subr.mxu0 0.0
        %564 = vmatpush1.msra.mxu0 0.0
        %565 = vmatprep.subr.mxu0 0.0
        %566 = vmatpush1.msra.mxu0 0.0
        %567 = vmatprep.subr.mxu0 0.0
        %568 = vmatpush1.msra.mxu0 0.0
        %569 = vmatprep.subr.mxu0 0.0
        %570 = vmatpush1.msra.mxu0 0.0
        %571 = vmatprep.subr.mxu0 0.0
        %572 = vmatpush1.msra.mxu0 0.0
        %573 = vmatprep.mubr.f32.mxu0 0.0
        %574 = vmatmul.mubr.f32.gmra.mrb[0].mxu0 %v430
        %v575 = vpop.f32.mrb[0].mxu0
        %v576 = vadd.f32 %v426, %v575
        %v577 = vpop.f32.mrb[0].mxu0
        %578 = vdwg.mxu0
        %579 = vrot.lane.b32.xlu0 %v264, 96
        %v580 = vpop.permute.xlu0 %579
        %581 = vrot.lane.b32.xlu0 %v261, 96
        %v582 = vpop.permute.xlu0 %581
        %583 = vrot.lane.b32.xlu0 %v265, 96
        %v584 = vpop.permute.xlu0 %583
        %vm585 = vcmask 785408
        %v586 = vsel %vm585, %v580, %v582
        %v587 = vsel %vm585, %v582, %v584
        %v589 = vsel %vm277, %v245, 0
        %v591 = vsel %vm281, %v586, 0
        %v593 = vsel %vm281, %v587, 0
        %v595 = vsel %vm281, %v584, 0
        %597 = vmatprep.subr.mxu0 %v593
        %598 = vmatpush1.msra.mxu0 %v591
        %599 = vmatprep.subr.mxu0 0.0
        %600 = vmatpush1.msra.mxu0 0.0
        %601 = vmatprep.subr.mxu0 0.0
        %602 = vmatpush1.msra.mxu0 0.0
        %603 = vmatprep.subr.mxu0 0.0
        %604 = vmatpush1.msra.mxu0 0.0
        %605 = vmatprep.subr.mxu0 0.0
        %606 = vmatpush1.msra.mxu0 0.0
        %607 = vmatprep.subr.mxu0 0.0
        %608 = vmatpush1.msra.mxu0 0.0
        %609 = vmatprep.subr.mxu0 0.0
        %610 = vmatpush1.msra.mxu0 0.0
        %611 = vmatprep.subr.mxu0 0.0
        %612 = vmatpush1.msra.mxu0 0.0
        %613 = vmatprep.subr.mxu0 0.0
        %614 = vmatpush1.msra.mxu0 0.0
        %615 = vmatprep.subr.mxu0 0.0
        %616 = vmatpush1.msra.mxu0 0.0
        %617 = vmatprep.subr.mxu0 0.0
        %618 = vmatpush1.msra.mxu0 0.0
        %619 = vmatprep.subr.mxu0 0.0
        %620 = vmatpush1.msra.mxu0 0.0
        %621 = vmatprep.subr.mxu0 0.0
        %622 = vmatpush1.msra.mxu0 0.0
        %623 = vmatprep.subr.mxu0 0.0
        %624 = vmatpush1.msra.mxu0 0.0
        %625 = vmatprep.subr.mxu0 0.0
        %626 = vmatpush1.msra.mxu0 0.0
        %627 = vmatprep.subr.mxu0 0.0
        %628 = vmatpush1.msra.mxu0 0.0
        %629 = vmatprep.subr.mxu0 0.0
        %630 = vmatpush1.msra.mxu0 0.0
        %631 = vmatprep.subr.mxu0 0.0
        %632 = vmatpush1.msra.mxu0 0.0
        %633 = vmatprep.subr.mxu0 0.0
        %634 = vmatpush1.msra.mxu0 0.0
        %635 = vmatprep.subr.mxu0 0.0
        %636 = vmatpush1.msra.mxu0 0.0
        %637 = vmatprep.subr.mxu0 0.0
        %638 = vmatpush1.msra.mxu0 0.0
        %639 = vmatprep.subr.mxu0 0.0
        %640 = vmatpush1.msra.mxu0 0.0
        %641 = vmatprep.subr.mxu0 0.0
        %642 = vmatpush1.msra.mxu0 0.0
        %643 = vmatprep.subr.mxu0 0.0
        %644 = vmatpush1.msra.mxu0 0.0
        %645 = vmatprep.subr.mxu0 0.0
        %646 = vmatpush1.msra.mxu0 0.0
        %647 = vmatprep.subr.mxu0 0.0
        %648 = vmatpush1.msra.mxu0 0.0
        %649 = vmatprep.subr.mxu0 0.0
        %650 = vmatpush1.msra.mxu0 0.0
        %651 = vmatprep.subr.mxu0 0.0
        %652 = vmatpush1.msra.mxu0 0.0
        %653 = vmatprep.subr.mxu0 0.0
        %654 = vmatpush1.msra.mxu0 0.0
        %655 = vmatprep.subr.mxu0 0.0
        %656 = vmatpush1.msra.mxu0 0.0
        %657 = vmatprep.subr.mxu0 0.0
        %658 = vmatpush1.msra.mxu0 0.0
        %659 = vmatprep.subr.mxu0 0.0
        %660 = vmatpush1.msra.mxu0 0.0
        %661 = vmatprep.mubr.f32.mxu0 0.0
        %662 = vmatmul.mubr.f32.gmra.mrb[0].mxu0 %v589
        %v663 = vpop.f32.mrb[0].mxu0
        %v664 = vadd.f32 0.0, %v663
        %v665 = vpop.f32.mrb[0].mxu0
        %v666 = vadd.f32 0.0, %v665
        %667 = vdwg.mxu0
        %668 = vmatprep.subr.mxu0 0.0
        %669 = vmatpush1.msra.mxu0 %v595
        %670 = vmatprep.subr.mxu0 0.0
        %671 = vmatpush1.msra.mxu0 0.0
        %672 = vmatprep.subr.mxu0 0.0
        %673 = vmatpush1.msra.mxu0 0.0
        %674 = vmatprep.subr.mxu0 0.0
        %675 = vmatpush1.msra.mxu0 0.0
        %676 = vmatprep.subr.mxu0 0.0
        %677 = vmatpush1.msra.mxu0 0.0
        %678 = vmatprep.subr.mxu0 0.0
        %679 = vmatpush1.msra.mxu0 0.0
        %680 = vmatprep.subr.mxu0 0.0
        %681 = vmatpush1.msra.mxu0 0.0
        %682 = vmatprep.subr.mxu0 0.0
        %683 = vmatpush1.msra.mxu0 0.0
        %684 = vmatprep.subr.mxu0 0.0
        %685 = vmatpush1.msra.mxu0 0.0
        %686 = vmatprep.subr.mxu0 0.0
        %687 = vmatpush1.msra.mxu0 0.0
        %688 = vmatprep.subr.mxu0 0.0
        %689 = vmatpush1.msra.mxu0 0.0
        %690 = vmatprep.subr.mxu0 0.0
        %691 = vmatpush1.msra.mxu0 0.0
        %692 = vmatprep.subr.mxu0 0.0
        %693 = vmatpush1.msra.mxu0 0.0
        %694 = vmatprep.subr.mxu0 0.0
        %695 = vmatpush1.msra.mxu0 0.0
        %696 = vmatprep.subr.mxu0 0.0
        %697 = vmatpush1.msra.mxu0 0.0
        %698 = vmatprep.subr.mxu0 0.0
        %699 = vmatpush1.msra.mxu0 0.0
        %700 = vmatprep.subr.mxu0 0.0
        %701 = vmatpush1.msra.mxu0 0.0
        %702 = vmatprep.subr.mxu0 0.0
        %703 = vmatpush1.msra.mxu0 0.0
        %704 = vmatprep.subr.mxu0 0.0
        %705 = vmatpush1.msra.mxu0 0.0
        %706 = vmatprep.subr.mxu0 0.0
        %707 = vmatpush1.msra.mxu0 0.0
        %708 = vmatprep.subr.mxu0 0.0
        %709 = vmatpush1.msra.mxu0 0.0
        %710 = vmatprep.subr.mxu0 0.0
        %711 = vmatpush1.msra.mxu0 0.0
        %712 = vmatprep.subr.mxu0 0.0
        %713 = vmatpush1.msra.mxu0 0.0
        %714 = vmatprep.subr.mxu0 0.0
        %715 = vmatpush1.msra.mxu0 0.0
        %716 = vmatprep.subr.mxu0 0.0
        %717 = vmatpush1.msra.mxu0 0.0
        %718 = vmatprep.subr.mxu0 0.0
        %719 = vmatpush1.msra.mxu0 0.0
        %720 = vmatprep.subr.mxu0 0.0
        %721 = vmatpush1.msra.mxu0 0.0
        %722 = vmatprep.subr.mxu0 0.0
        %723 = vmatpush1.msra.mxu0 0.0
        %724 = vmatprep.subr.mxu0 0.0
        %725 = vmatpush1.msra.mxu0 0.0
        %726 = vmatprep.subr.mxu0 0.0
        %727 = vmatpush1.msra.mxu0 0.0
        %728 = vmatprep.subr.mxu0 0.0
        %729 = vmatpush1.msra.mxu0 0.0
        %730 = vmatprep.subr.mxu0 0.0
        %731 = vmatpush1.msra.mxu0 0.0
        %732 = vmatprep.mubr.f32.mxu0 0.0
        %733 = vmatmul.mubr.f32.gmra.mrb[0].mxu0 %v589
        %v734 = vpop.f32.mrb[0].mxu0
        %v735 = vadd.f32 0.0, %v734
        %v736 = vpop.f32.mrb[0].mxu0
        %737 = vdwg.mxu0
        %v738 = vadd.f32 %v505, %v664
        %v739 = vadd.f32 %v507, %v666
        %v740 = vadd.f32 %v576, %v735
        %v741 = vsel %vm227, 1, 0
        %v742 = vsel %vm228, 1, 0
        %vm743 = vcmp.eq.s32.totalorder %v741, 1
        %vm744 = vcmp.eq.s32.totalorder %v742, 1
        %v745 = vsel %vm743, %v738, 0.0
        %v746 = vsel %vm744, %v739, 0.0
        %v747 = vsel %vm233, 1, 0
        %v748 = vsel %vm234, 1, 0
        %vm749 = vcmp.eq.s32.totalorder %v747, 1
        %vm750 = vcmp.eq.s32.totalorder %v748, 1
        %754 = vrot.lane.b32.xlu0 %v738, 127
        %v755 = vpop.permute.xlu0 %754
        %756 = vrot.lane.b32.xlu0 %v739, 127
        %v757 = vpop.permute.xlu0 %756
        %758 = vrot.lane.b32.xlu0 %v740, 127
        %v759 = vpop.permute.xlu0 %758
        %vm760 = vcmask 1039360
        %v761 = vsel %vm760, %v755, %v757
        %v762 = vsel %vm760, %v757, %v759
        %v765 = vsel %vm749, %v761, 0.0
        %v766 = vsel %vm750, %v762, 0.0
        %v768 = vsel %vm277, %v248, 0
        %v771 = vsel %vm281, %v765, 0
        %v774 = vsel %vm281, %v766, 0
        %776 = vmatprep.subr.mxu0 %v774
        %777 = vmatpush1.msra.mxu0 %v771
        %778 = vmatprep.subr.mxu0 0.0
        %779 = vmatpush1.msra.mxu0 0.0
        %780 = vmatprep.subr.mxu0 0.0
        %781 = vmatpush1.msra.mxu0 0.0
        %782 = vmatprep.subr.mxu0 0.0
        %783 = vmatpush1.msra.mxu0 0.0
        %784 = vmatprep.subr.mxu0 0.0
        %785 = vmatpush1.msra.mxu0 0.0
        %786 = vmatprep.subr.mxu0 0.0
        %787 = vmatpush1.msra.mxu0 0.0
        %788 = vmatprep.subr.mxu0 0.0
        %789 = vmatpush1.msra.mxu0 0.0
        %790 = vmatprep.subr.mxu0 0.0
        %791 = vmatpush1.msra.mxu0 0.0
        %792 = vmatprep.subr.mxu0 0.0
        %793 = vmatpush1.msra.mxu0 0.0
        %794 = vmatprep.subr.mxu0 0.0
        %795 = vmatpush1.msra.mxu0 0.0
        %796 = vmatprep.subr.mxu0 0.0
        %797 = vmatpush1.msra.mxu0 0.0
        %798 = vmatprep.subr.mxu0 0.0
        %799 = vmatpush1.msra.mxu0 0.0
        %800 = vmatprep.subr.mxu0 0.0
        %801 = vmatpush1.msra.mxu0 0.0
        %802 = vmatprep.subr.mxu0 0.0
        %803 = vmatpush1.msra.mxu0 0.0
        %804 = vmatprep.subr.mxu0 0.0
        %805 = vmatpush1.msra.mxu0 0.0
        %806 = vmatprep.subr.mxu0 0.0
        %807 = vmatpush1.msra.mxu0 0.0
        %808 = vmatprep.subr.mxu0 0.0
        %809 = vmatpush1.msra.mxu0 0.0
        %810 = vmatprep.subr.mxu0 0.0
        %811 = vmatpush1.msra.mxu0 0.0
        %812 = vmatprep.subr.mxu0 0.0
        %813 = vmatpush1.msra.mxu0 0.0
        %814 = vmatprep.subr.mxu0 0.0
        %815 = vmatpush1.msra.mxu0 0.0
        %816 = vmatprep.subr.mxu0 0.0
        %817 = vmatpush1.msra.mxu0 0.0
        %818 = vmatprep.subr.mxu0 0.0
        %819 = vmatpush1.msra.mxu0 0.0
        %820 = vmatprep.subr.mxu0 0.0
        %821 = vmatpush1.msra.mxu0 0.0
        %822 = vmatprep.subr.mxu0 0.0
        %823 = vmatpush1.msra.mxu0 0.0
        %824 = vmatprep.subr.mxu0 0.0
        %825 = vmatpush1.msra.mxu0 0.0
        %826 = vmatprep.subr.mxu0 0.0
        %827 = vmatpush1.msra.mxu0 0.0
        %828 = vmatprep.subr.mxu0 0.0
        %829 = vmatpush1.msra.mxu0 0.0
        %830 = vmatprep.subr.mxu0 0.0
        %831 = vmatpush1.msra.mxu0 0.0
        %832 = vmatprep.subr.mxu0 0.0
        %833 = vmatpush1.msra.mxu0 0.0
        %834 = vmatprep.subr.mxu0 0.0
        %835 = vmatpush1.msra.mxu0 0.0
        %836 = vmatprep.subr.mxu0 0.0
        %837 = vmatpush1.msra.mxu0 0.0
        %838 = vmatprep.subr.mxu0 0.0
        %839 = vmatpush1.msra.mxu0 0.0
        %840 = vmatprep.mubr.f32.mxu0 0.0
        %841 = vmatmul.mubr.f32.gmra.mrb[0].mxu0 %v768
        %v842 = vpop.f32.mrb[0].mxu0
        %v843 = vadd.f32 0.0, %v842
        %v844 = vpop.f32.mrb[0].mxu0
        %v845 = vadd.f32 0.0, %v844
        %846 = vdwg.mxu0
        %v848 = vsel %vm277, %v246, 0
        %v851 = vsel %vm281, %v745, 0
        %v854 = vsel %vm281, %v746, 0
        %856 = vmatprep.subr.mxu0 %v854
        %857 = vmatpush1.msra.mxu0 %v851
        %858 = vmatprep.subr.mxu0 0.0
        %859 = vmatpush1.msra.mxu0 0.0
        %860 = vmatprep.subr.mxu0 0.0
        %861 = vmatpush1.msra.mxu0 0.0
        %862 = vmatprep.subr.mxu0 0.0
        %863 = vmatpush1.msra.mxu0 0.0
        %864 = vmatprep.subr.mxu0 0.0
        %865 = vmatpush1.msra.mxu0 0.0
        %866 = vmatprep.subr.mxu0 0.0
        %867 = vmatpush1.msra.mxu0 0.0
        %868 = vmatprep.subr.mxu0 0.0
        %869 = vmatpush1.msra.mxu0 0.0
        %870 = vmatprep.subr.mxu0 0.0
        %871 = vmatpush1.msra.mxu0 0.0
        %872 = vmatprep.subr.mxu0 0.0
        %873 = vmatpush1.msra.mxu0 0.0
        %874 = vmatprep.subr.mxu0 0.0
        %875 = vmatpush1.msra.mxu0 0.0
        %876 = vmatprep.subr.mxu0 0.0
        %877 = vmatpush1.msra.mxu0 0.0
        %878 = vmatprep.subr.mxu0 0.0
        %879 = vmatpush1.msra.mxu0 0.0
        %880 = vmatprep.subr.mxu0 0.0
        %881 = vmatpush1.msra.mxu0 0.0
        %882 = vmatprep.subr.mxu0 0.0
        %883 = vmatpush1.msra.mxu0 0.0
        %884 = vmatprep.subr.mxu0 0.0
        %885 = vmatpush1.msra.mxu0 0.0
        %886 = vmatprep.subr.mxu0 0.0
        %887 = vmatpush1.msra.mxu0 0.0
        %888 = vmatprep.subr.mxu0 0.0
        %889 = vmatpush1.msra.mxu0 0.0
        %890 = vmatprep.subr.mxu0 0.0
        %891 = vmatpush1.msra.mxu0 0.0
        %892 = vmatprep.subr.mxu0 0.0
        %893 = vmatpush1.msra.mxu0 0.0
        %894 = vmatprep.subr.mxu0 0.0
        %895 = vmatpush1.msra.mxu0 0.0
        %896 = vmatprep.subr.mxu0 0.0
        %897 = vmatpush1.msra.mxu0 0.0
        %898 = vmatprep.subr.mxu0 0.0
        %899 = vmatpush1.msra.mxu0 0.0
        %900 = vmatprep.subr.mxu0 0.0
        %901 = vmatpush1.msra.mxu0 0.0
        %902 = vmatprep.subr.mxu0 0.0
        %903 = vmatpush1.msra.mxu0 0.0
        %904 = vmatprep.subr.mxu0 0.0
        %905 = vmatpush1.msra.mxu0 0.0
        %906 = vmatprep.subr.mxu0 0.0
        %907 = vmatpush1.msra.mxu0 0.0
        %908 = vmatprep.subr.mxu0 0.0
        %909 = vmatpush1.msra.mxu0 0.0
        %910 = vmatprep.subr.mxu0 0.0
        %911 = vmatpush1.msra.mxu0 0.0
        %912 = vmatprep.subr.mxu0 0.0
        %913 = vmatpush1.msra.mxu0 0.0
        %914 = vmatprep.subr.mxu0 0.0
        %915 = vmatpush1.msra.mxu0 0.0
        %916 = vmatprep.subr.mxu0 0.0
        %917 = vmatpush1.msra.mxu0 0.0
        %918 = vmatprep.subr.mxu0 0.0
        %919 = vmatpush1.msra.mxu0 0.0
        %920 = vmatprep.mubr.f32.mxu0 0.0
        %921 = vmatmul.mubr.f32.gmra.mrb[0].mxu0 %v848
        %v922 = vpop.f32.mrb[0].mxu0
        %v923 = vadd.f32 %v843, %v922
        %v924 = vpop.f32.mrb[0].mxu0
        %v925 = vadd.f32 %v845, %v924
        %926 = vdwg.mxu0
        %v927 = vsel %vm239, 1, 0
        %v928 = vsel %vm240, 1, 0
        %vm929 = vcmp.eq.s32.totalorder %v927, 1
        %vm930 = vcmp.eq.s32.totalorder %v928, 1
        %931 = vrot.lane.b32.xlu0 %v738, 126
        %v932 = vpop.permute.xlu0 %931
        %933 = vrot.lane.b32.xlu0 %v739, 126
        %v934 = vpop.permute.xlu0 %933
        %935 = vrot.lane.b32.xlu0 %v740, 126
        %v936 = vpop.permute.xlu0 %935
        %vm937 = vcmask 1031168
        %v938 = vsel %vm937, %v932, %v934
        %v939 = vsel %vm937, %v934, %v936
        %v942 = vsel %vm929, %v938, 0.0
        %v943 = vsel %vm930, %v939, 0.0
        %v945 = vsel %vm277, %v250, 0
        %v948 = vsel %vm281, %v942, 0
        %v951 = vsel %vm281, %v943, 0
        %953 = vmatprep.subr.mxu0 %v951
        %954 = vmatpush1.msra.mxu0 %v948
        %955 = vmatprep.subr.mxu0 0.0
        %956 = vmatpush1.msra.mxu0 0.0
        %957 = vmatprep.subr.mxu0 0.0
        %958 = vmatpush1.msra.mxu0 0.0
        %959 = vmatprep.subr.mxu0 0.0
        %960 = vmatpush1.msra.mxu0 0.0
        %961 = vmatprep.subr.mxu0 0.0
        %962 = vmatpush1.msra.mxu0 0.0
        %963 = vmatprep.subr.mxu0 0.0
        %964 = vmatpush1.msra.mxu0 0.0
        %965 = vmatprep.subr.mxu0 0.0
        %966 = vmatpush1.msra.mxu0 0.0
        %967 = vmatprep.subr.mxu0 0.0
        %968 = vmatpush1.msra.mxu0 0.0
        %969 = vmatprep.subr.mxu0 0.0
        %970 = vmatpush1.msra.mxu0 0.0
        %971 = vmatprep.subr.mxu0 0.0
        %972 = vmatpush1.msra.mxu0 0.0
        %973 = vmatprep.subr.mxu0 0.0
        %974 = vmatpush1.msra.mxu0 0.0
        %975 = vmatprep.subr.mxu0 0.0
        %976 = vmatpush1.msra.mxu0 0.0
        %977 = vmatprep.subr.mxu0 0.0
        %978 = vmatpush1.msra.mxu0 0.0
        %979 = vmatprep.subr.mxu0 0.0
        %980 = vmatpush1.msra.mxu0 0.0
        %981 = vmatprep.subr.mxu0 0.0
        %982 = vmatpush1.msra.mxu0 0.0
        %983 = vmatprep.subr.mxu0 0.0
        %984 = vmatpush1.msra.mxu0 0.0
        %985 = vmatprep.subr.mxu0 0.0
        %986 = vmatpush1.msra.mxu0 0.0
        %987 = vmatprep.subr.mxu0 0.0
        %988 = vmatpush1.msra.mxu0 0.0
        %989 = vmatprep.subr.mxu0 0.0
        %990 = vmatpush1.msra.mxu0 0.0
        %991 = vmatprep.subr.mxu0 0.0
        %992 = vmatpush1.msra.mxu0 0.0
        %993 = vmatprep.subr.mxu0 0.0
        %994 = vmatpush1.msra.mxu0 0.0
        %995 = vmatprep.subr.mxu0 0.0
        %996 = vmatpush1.msra.mxu0 0.0
        %997 = vmatprep.subr.mxu0 0.0
        %998 = vmatpush1.msra.mxu0 0.0
        %999 = vmatprep.subr.mxu0 0.0
        %1000 = vmatpush1.msra.mxu0 0.0
        %1001 = vmatprep.subr.mxu0 0.0
        %1002 = vmatpush1.msra.mxu0 0.0
        %1003 = vmatprep.subr.mxu0 0.0
        %1004 = vmatpush1.msra.mxu0 0.0
        %1005 = vmatprep.subr.mxu0 0.0
        %1006 = vmatpush1.msra.mxu0 0.0
        %1007 = vmatprep.subr.mxu0 0.0
        %1008 = vmatpush1.msra.mxu0 0.0
        %1009 = vmatprep.subr.mxu0 0.0
        %1010 = vmatpush1.msra.mxu0 0.0
        %1011 = vmatprep.subr.mxu0 0.0
        %1012 = vmatpush1.msra.mxu0 0.0
        %1013 = vmatprep.subr.mxu0 0.0
        %1014 = vmatpush1.msra.mxu0 0.0
        %1015 = vmatprep.subr.mxu0 0.0
        %1016 = vmatpush1.msra.mxu0 0.0
        %1017 = vmatprep.mubr.f32.mxu0 0.0
        %1018 = vmatmul.mubr.f32.gmra.mrb[0].mxu0 %v945
        %v1019 = vpop.f32.mrb[0].mxu0
        %v1020 = vadd.f32 0.0, %v1019
        %v1021 = vpop.f32.mrb[0].mxu0
        %v1022 = vadd.f32 0.0, %v1021
        %1023 = vdwg.mxu0
        %v1024 = vadd.f32 %v923, %v1020
        %v1025 = vadd.f32 %v925, %v1022
        %1027 = vset.pattern.permute.xlu0 0
        %1028 = vperm.xlu0 %1027, %v251
        %v1029 = vpop.permute.xlu0 %1028
        %v1031 = vadd.f32 %v1024, %v1029
        %v1032 = vadd.f32 %v1025, %v1029
        %1033 = vst [vmem:[%s190] sm:$0xff] %v1031
        %1034 = vst [vmem:[%s190 + $0x8] sm:$0xff] %v1032
        %s1035 = sand.u32 %s115, 1
        %s1036 = scalar_lea.sflag [#allocation3], %s1035
        %s1037 = sand.u32 %s115, 1
        %s1038 = smul.addr %s1037, 16
        %s1039 = scalar_lea.vmem [#allocation2], %s1038
        // Predicated region
        $region37: #{tpu_custom_call.1} parent=35 // pred_check
          %p1040 = pneg %p125
        $region38: #{tpu_custom_call.1} parent=35 // pred_check_branch
          %1042 = sbr.rel (%p1040) target = $region40
        $region39: #{tpu_custom_call.1} parent=35 // pred_region
          %s1044 = ssub.s32 256, 256
          %1045 = vsyncadd %s1036, %s1044
          %s1046 = smul.addr %s18, 2
          %s1047 = smul.addr %s1046, 128
          %s1048 = scalar_lea.hbm %s4, %s1047
          %s1050 = sshll.u32 %s1039, 4
          %s1051 = int_to_ptr.vmem [resolvable:$true] %s1050
          %1053 = dma.vmem_to_hbm [thread:$0]  %s1051, 256, %s1048, %s1036
        $region40: #{tpu_custom_call.1} parent=35 // pred_fallthru
          _
      $region36: #{tpu_custom_call.1} parent=5 // pred_fallthru
        _
      %p1054 = scmp.le.s32.totalorder 2, %s13
      // Predicated region
      $region41: #{tpu_custom_call.1} parent=5 // pred_check
        %p1055 = pneg %p1054
      $region42: #{tpu_custom_call.1} parent=5 // pred_check_branch
        %1057 = sbr.rel (%p1055) target = $region44
      $region43: #{tpu_custom_call.1} parent=5 // pred_region
        %s1058 = ssub.s32 %s13, 2
        // Predicated region
        $region45: #{tpu_custom_call.1} parent=43 // pred_check
          %p1059 = pneg %p131
        $region46: #{tpu_custom_call.1} parent=43 // pred_check_branch
          %1061 = sbr.rel (%p1059) target = $region48
        $region47: #{tpu_custom_call.1} parent=43 // pred_region
          %s1062 = sand.u32 %s116, 1
          %s1063 = scalar_lea.sflag [#allocation3], %s1062
          %s1064 = sand.u32 %s116, 1
          %s1065 = smul.addr %s1064, 16
          %s1066 = scalar_lea.vmem [#allocation2], %s1065
          %1067 = dma.done %s1063, 256
        $region48: #{tpu_custom_call.1} parent=43 // pred_fallthru
          _
      $region44: #{tpu_custom_call.1} parent=5 // pred_fallthru
        _
    $region6: #{tpu_custom_call.1} parent=1 // loop_footer
      %s17 = sadd.s32 1, %s13
    $region7: #{tpu_custom_call.1} parent=1 // loop_footer_branch
      %12 = sbr.rel target = $region3
    $region8: #{tpu_custom_call.1} parent=1 // loop_exit
      _
    %1068 = vsyncpa [#allocation3], 1
    %s1069 = scalar_lea.sflag [#allocation3], 1
    %1070 = vsyncpa %s1069, 1

</llo_original>
